<compile_context>
chip_gen: v6e
topology: v6e:2x2x1
jax: 0.10.0
libtpu: 0.0.40
codegen_flags: <defaults>
</compile_context>

<pallas_src>
import functools
import math

import jax
import jax.numpy as jnp
from jax import lax
from jax.experimental import pallas as pl
from jax.experimental.pallas import tpu as pltpu

LANE = 128


def _pad_to_lane(c):
    return ((c + LANE - 1) // LANE) * LANE


def _vmem_limit_bytes():
    # Generation-aware VMEM cap (review): ~96 MiB on v5e/v6e (128 MiB physical),
    # ~48 MiB on v7x (64 MiB physical).
    try:
        cap = int(getattr(pltpu.get_tpu_info(), "vmem_capacity_bytes", 64 * 1024 * 1024))
    except Exception:
        cap = 64 * 1024 * 1024
    return max(32 * 1024 * 1024, (cap * 3) // 4)


_VMEM_LIMIT = _vmem_limit_bytes()


def _cparams(grid_parallel):
    if grid_parallel:
        return pltpu.CompilerParams(dimension_semantics=("parallel",),
                                    vmem_limit_bytes=_VMEM_LIMIT)
    return pltpu.CompilerParams(vmem_limit_bytes=_VMEM_LIMIT)


# ------------------------------ Pallas kernels -------------------------------


def _sinusoidal_kernel(t_ref, freq2_ref, o_ref):
    """SinusoidalPositionEmbeddings: out = [sin(t*f) | cos(t*f)].

    freq2 holds the frequency vector twice, so the sin|cos halves come from one
    lane-select and ONE full-width store (no sub-lane-offset concat / partial stores).
    """
    B, D = o_ref.shape
    half = D // 2
    arg = t_ref[...] * freq2_ref[...]                      # (B, 2*half)
    col = lax.broadcasted_iota(jnp.int32, (B, D), 1)
    o_ref[...] = jnp.where(col < half, jnp.sin(arg), jnp.cos(arg))


def _time_cond_kernel(t_ref, freq2_ref, w1_ref, b1_ref, w2_ref, b2_ref, o_ref):
    """Fused time conditioning: sinusoidal embedding -> Linear -> SiLU -> Linear.

    Weight/bias lane dims are zero-padded to 128 so the cond_vec store is lane-dense.
    """
    B = t_ref.shape[0]
    D = freq2_ref.shape[-1]
    half = D // 2
    arg = t_ref[...] * freq2_ref[...]
    col = lax.broadcasted_iota(jnp.int32, (B, D), 1)
    emb = jnp.where(col < half, jnp.sin(arg), jnp.cos(arg))         # (B, ted)
    h = jnp.dot(emb, w1_ref[...], preferred_element_type=jnp.float32) + b1_ref[...]
    h = h * jax.nn.sigmoid(h)
    o_ref[...] = jnp.dot(h, w2_ref[...], preferred_element_type=jnp.float32) + b2_ref[...]


def _conv3_kernel(x_ref, s_ref, t_ref, w_ref, b_ref, y_ref, mu_ref, m2_ref, *,
                  L, apply_act):
    """[prev-layer BN+FiLM affine + SiLU] -> Conv1d(k=3, pad=1) -> partial BN stats.

    x_ref  : (Bt, L, Cin_p)  pre-affine activation of the previous conv (or raw input)
    s_ref  : (Bt, 1, Cin_p)  folded per-(batch, channel) scale   (ignored if !apply_act)
    t_ref  : (Bt, 1, Cin_p)  folded per-(batch, channel) shift
    w_ref  : (3, Cin_p, Cout_p) bf16 conv taps (zero rows/cols beyond true dims)
    b_ref  : (1, Cout_p)     conv bias (f32)
    y_ref  : (Bt, L, Cout_p) pre-norm conv output (f32)
    mu_ref : (1, 1, Cout_p)  per-block per-channel mean over Bt*L rows
    m2_ref : (1, 1, Cout_p)  per-block per-channel sum of squared deviations

    The k=3 halo is handled in-kernel: pltpu.roll along the sublane (row) axis plus
    first/last-row-of-each-batch masks; no HBM-side halo pad, no im2col concat.
    """
    Bt, _, cin = x_ref.shape
    M = Bt * L
    x = x_ref[...]
    if apply_act:
        a = x * s_ref[...] + t_ref[...]
        x = a * jax.nn.sigmoid(a)                           # SiLU, f32
    x2 = x.reshape(M, cin)

    row = lax.broadcasted_iota(jnp.int32, (M, 1), 0)
    prev = jnp.where(row % L == 0, 0.0, pltpu.roll(x2, shift=1, axis=0))
    nxt = jnp.where(row % L == L - 1, 0.0, pltpu.roll(x2, shift=M - 1, axis=0))

    # Three K=Cin dots accumulated in f32 (bf16 MXU operands).
    acc = jnp.dot(prev.astype(jnp.bfloat16), w_ref[0], preferred_element_type=jnp.float32)
    acc = acc + jnp.dot(x2.astype(jnp.bfloat16), w_ref[1], preferred_element_type=jnp.float32)
    acc = acc + jnp.dot(nxt.astype(jnp.bfloat16), w_ref[2], preferred_element_type=jnp.float32)
    y = acc + b_ref[...]                                    # (M, Cout_p) f32

    y_ref[...] = y.reshape(Bt, L, -1)
    mu = jnp.sum(y, axis=0, keepdims=True) * (1.0 / M)      # (1, Cout_p)
    d = y - mu
    mu_ref[0] = mu
    m2_ref[0] = jnp.sum(d * d, axis=0, keepdims=True)


def _final_conv_kernel(x_ref, s_ref, t_ref, w_ref, b_ref, o_ref):
    """Fused affine+SiLU of the last block output + pointwise Conv1d (1x1)."""
    Bt, L, cin = x_ref.shape
    a = x_ref[...] * s_ref[...] + t_ref[...]
    x = (a * jax.nn.sigmoid(a)).reshape(Bt * L, cin)
    y = (jnp.dot(x.astype(jnp.bfloat16), w_ref[...],
                 preferred_element_type=jnp.float32) + b_ref[...])
    o_ref[...] = y.reshape(Bt, L, -1)


# ------------------------------ kernel wrappers -------------------------------


def _freq2(dim):
    half = dim // 2
    # Exact PyTorch formula (including its behaviour when half == 1).
    f = jnp.exp(jnp.arange(half, dtype=jnp.float32) * (-math.log(10000.0) / (half - 1)))
    return jnp.concatenate([f, f]).reshape(1, 2 * half)


def sinusoidal_embedding(t, dim):
    """Pallas implementation of SinusoidalPositionEmbeddings.forward (the spec module)."""
    B = t.shape[0]
    half = dim // 2
    out = pl.pallas_call(
        _sinusoidal_kernel,
        out_shape=jax.ShapeDtypeStruct((B, 2 * half), jnp.float32),
        in_specs=[pl.BlockSpec(memory_space=pltpu.MemorySpace.VMEM)] * 2,
        out_specs=pl.BlockSpec(memory_space=pltpu.MemorySpace.VMEM),
        compiler_params=_cparams(False),
    )(t.astype(jnp.float32).reshape(B, 1), _freq2(dim))
    if dim % 2 == 1:
        out = jnp.pad(out, ((0, 0), (0, 1)))
    return out


def time_conditioning(params, t, ted):
    """One fused Pallas call: sinusoidal embedding + time MLP -> cond_vec (B, ted)."""
    B = t.shape[0]
    ted_p = params["time_w2"].shape[-1]
    cond_p = pl.pallas_call(
        _time_cond_kernel,
        out_shape=jax.ShapeDtypeStruct((B, ted_p), jnp.float32),
        in_specs=[pl.BlockSpec(memory_space=pltpu.MemorySpace.VMEM)] * 6,
        out_specs=pl.BlockSpec(memory_space=pltpu.MemorySpace.VMEM),
        compiler_params=_cparams(False),
    )(t.astype(jnp.float32).reshape(B, 1), _freq2(ted),
      params["time_w1"], params["time_b1"], params["time_w2"], params["time_b2"])
    return cond_p[:, :ted]


def _pick_bt(B, L, cin_p, cout_p):
    """Batches per grid step: target >= 256 matmul rows, stay inside VMEM, divide B."""
    bt = min(B, max(1, -(-256 // L)))
    while B % bt:
        bt -= 1

    def step_bytes(b):
        # double-buffered input + output tiles (f32) + bf16 weights
        return 8 * b * L * (cin_p + cout_p) + 2 * 3 * cin_p * cout_p

    budget = _VMEM_LIMIT // 2
    while bt > 1 and step_bytes(bt) > budget:
        bt -= 1
        while B % bt:
            bt -= 1
    return bt


def conv3(x, S, T, w, b, *, apply_act):
    """Fused affine+SiLU + Conv1d(k=3,pad=1) + per-block BN stats, gridded over batch tiles."""
    B, L, cin_p = x.shape
    cout_p = w.shape[-1]
    bt = _pick_bt(B, L, cin_p, cout_p)
    nb = B // bt
    # TODO(synk): add an L-tile grid axis (with stats carried in VMEM scratch) for very
    # long sequences on v7x; full-L blocks are used here since the demo L is tiny.
    kernel = functools.partial(_conv3_kernel, L=L, apply_act=apply_act)
    y, mu, m2 = pl.pallas_call(
        kernel,
        grid=(nb,),
        in_specs=[
            pl.BlockSpec((bt, L, cin_p), lambda i: (i, 0, 0)),
            pl.BlockSpec((bt, 1, cin_p), lambda i: (i, 0, 0)),
            pl.BlockSpec((bt, 1, cin_p), lambda i: (i, 0, 0)),
            pl.BlockSpec((3, cin_p, cout_p), lambda i: (0, 0, 0)),
            pl.BlockSpec((1, cout_p), lambda i: (0, 0)),
        ],
        out_specs=(
            pl.BlockSpec((bt, L, cout_p), lambda i: (i, 0, 0)),
            pl.BlockSpec((1, 1, cout_p), lambda i: (i, 0, 0)),
            pl.BlockSpec((1, 1, cout_p), lambda i: (i, 0, 0)),
        ),
        out_shape=(
            jax.ShapeDtypeStruct((B, L, cout_p), jnp.float32),
            jax.ShapeDtypeStruct((nb, 1, cout_p), jnp.float32),
            jax.ShapeDtypeStruct((nb, 1, cout_p), jnp.float32),
        ),
        compiler_params=_cparams(True),
    )(x, S, T, w, b)
    return y, mu, m2


def final_conv(x, S, T, w, b):
    """Fused affine+SiLU + 1x1 conv, gridded over batch tiles (parallel)."""
    B, L, cin_p = x.shape
    cout_p = w.shape[-1]
    bt = _pick_bt(B, L, cin_p, cout_p)
    nb = B // bt
    # TODO(synk): for 1 real output channel the 128-lane-padded store moves 128x the
    # useful bytes; a packed (L-in-lanes) layout for the last layer would reduce this.
    return pl.pallas_call(
        _final_conv_kernel,
        grid=(nb,),
        in_specs=[
            pl.BlockSpec((bt, L, cin_p), lambda i: (i, 0, 0)),
            pl.BlockSpec((bt, 1, cin_p), lambda i: (i, 0, 0)),
            pl.BlockSpec((bt, 1, cin_p), lambda i: (i, 0, 0)),
            pl.BlockSpec((cin_p, cout_p), lambda i: (0, 0)),
            pl.BlockSpec((1, cout_p), lambda i: (0, 0)),
        ],
        out_specs=pl.BlockSpec((bt, L, cout_p), lambda i: (i, 0, 0)),
        out_shape=jax.ShapeDtypeStruct((B, L, cout_p), jnp.float32),
        compiler_params=_cparams(True),
    )(x, S, T, w, b)


# -------------------------------- parameters ---------------------------------


def _normal(key, shape, scale):
    return scale * jax.random.normal(key, shape, dtype=jnp.float32)


def make_linear(key, d_in, d_out):
    kw, kb = jax.random.split(key)
    return {"w": _normal(kw, (d_in, d_out), 1.0 / math.sqrt(d_in)),
            "b": _normal(kb, (d_out,), 0.02)}


def _ones_padded(c, cp):
    return jnp.zeros((cp,), jnp.float32).at[:c].set(1.0)


def make_convblock(key, in_c, out_c, cond_dim):
    in_cp, out_cp = _pad_to_lane(in_c), _pad_to_lane(out_c)
    ks = jax.random.split(key, 4)
    w1 = jnp.zeros((3, in_cp, out_cp), jnp.float32).at[:, :in_c, :out_c].set(
        _normal(ks[0], (3, in_c, out_c), 1.0 / math.sqrt(3 * in_c)))
    w2 = jnp.zeros((3, out_cp, out_cp), jnp.float32).at[:, :out_c, :out_c].set(
        _normal(ks[1], (3, out_c, out_c), 1.0 / math.sqrt(3 * out_c)))
    return {
        "in_c": in_c, "out_c": out_c,
        "conv1_w": w1.astype(jnp.bfloat16),           # bf16 MXU operands
        "conv1_b": jnp.zeros((1, out_cp), jnp.float32),
        "bn1_g": _ones_padded(out_c, out_cp),
        "bn1_b": jnp.zeros((out_cp,), jnp.float32),
        "conv2_w": w2.astype(jnp.bfloat16),
        "conv2_b": jnp.zeros((1, out_cp), jnp.float32),
        "bn2_g": _ones_padded(out_c, out_cp),
        "bn2_b": jnp.zeros((out_cp,), jnp.float32),
        "film1": make_linear(ks[2], cond_dim, 2 * out_c),
        "film2": make_linear(ks[3], cond_dim, 2 * out_c),
    }


def init_unet(key, *, in_channels, cond_channels, time_embed_dim, base_channels, depth):
    n_keys = 2 * depth + 2 + 5
    keys = list(jax.random.split(key, n_keys))
    it = iter(keys)
    params = {}

    ted = time_embed_dim
    hid = 2 * ted
    ted_p, hid_p = _pad_to_lane(ted), _pad_to_lane(hid)
    lin1 = make_linear(next(it), ted, hid)
    lin2 = make_linear(next(it), hid, ted)
    params["time_w1"] = jnp.zeros((ted, hid_p), jnp.float32).at[:, :hid].set(lin1["w"])
    params["time_b1"] = jnp.zeros((1, hid_p), jnp.float32).at[0, :hid].set(lin1["b"])
    params["time_w2"] = jnp.zeros((hid_p, ted_p), jnp.float32).at[:hid, :ted].set(lin2["w"])
    params["time_b2"] = jnp.zeros((1, ted_p), jnp.float32).at[0, :ted].set(lin2["b"])

    in_c_total = in_channels + cond_channels
    params["inc"] = make_convblock(next(it), in_c_total, base_channels, ted)

    ch = base_channels
    enc_channels = [ch]
    downs = []
    for _ in range(depth):
        downs.append(make_convblock(next(it), ch, ch * 2, ted))
        ch *= 2
        enc_channels.append(ch)
    params["downs"] = downs

    params["bottleneck"] = make_convblock(next(it), ch, ch, ted)

    ups = []
    for skip_c in reversed(enc_channels[:-1]):
        ups.append(make_convblock(next(it), ch + skip_c, skip_c, ted))
        ch = skip_c
    params["ups"] = ups

    base_cp = _pad_to_lane(base_channels)
    out_cp = _pad_to_lane(in_channels)
    ow = jnp.zeros((base_cp, out_cp), jnp.float32).at[:base_channels, :in_channels].set(
        _normal(next(it), (base_channels, in_channels), 1.0 / math.sqrt(base_channels)))
    params["out_w"] = ow.astype(jnp.bfloat16)
    params["out_b"] = jnp.zeros((1, out_cp), jnp.float32)
    return params


# ------------------------------- forward pass ---------------------------------


def silu(x):
    return x * jax.nn.sigmoid(x)


def _pad_last(x, cp):
    c = x.shape[-1]
    if c == cp:
        return x
    pad = [(0, 0)] * (x.ndim - 1) + [(0, cp - c)]
    return jnp.pad(x, pad)


def film_gamma_beta(lin, cond_vec, out_c, out_cp):
    gb = silu(cond_vec) @ lin["w"] + lin["b"]          # (B, 2*out_c)
    gamma = _pad_last(gb[:, :out_c], out_cp)
    beta = _pad_last(gb[:, out_c:], out_cp)
    return gamma, beta


def fold_affine(mu_blk, m2_blk, total_n, bn_g, bn_b, gamma, beta):
    """Merge per-block centered moments (Chan) and fold train-mode BN (eps=1e-5,
    biased var) + FiLM ((1+gamma)*BN(y)+beta) into one per-(batch,channel) S,T."""
    nb = mu_blk.shape[0]
    n_b = total_n / nb
    mu_b = mu_blk[:, 0, :]                              # (nb, Cp)
    m2_b = m2_blk[:, 0, :]
    mean = jnp.mean(mu_b, axis=0)                       # equal block sizes
    m2 = jnp.sum(m2_b, axis=0) + n_b * jnp.sum((mu_b - mean[None, :]) ** 2, axis=0)
    var = jnp.maximum(m2 / total_n, 0.0)
    inv = lax.rsqrt(var + 1e-5)
    gs = bn_g * inv                                     # padded lanes stay exactly 0
    bs = bn_b - mean * gs
    S = (1.0 + gamma) * gs[None, :]                     # (B, Cp)
    T = (1.0 + gamma) * bs[None, :] + beta
    return S[:, None, :], T[:, None, :]                 # (B, 1, Cp)


def convblock_apply(p, y_in, S_in, T_in, cond_vec, apply_act):
    """Returns (pre-affine y, S, T): the affine+SiLU is deferred into the next conv."""
    B, L, _ = y_in.shape
    total_n = B * L
    out_c = p["out_c"]
    out_cp = p["conv1_w"].shape[-1]

    y1, mu1, m21 = conv3(y_in, S_in, T_in, p["conv1_w"], p["conv1_b"], apply_act=apply_act)
    g1, b1 = film_gamma_beta(p["film1"], cond_vec, out_c, out_cp)
    S1, T1 = fold_affine(mu1, m21, total_n, p["bn1_g"], p["bn1_b"], g1, b1)

    y2, mu2, m22 = conv3(y1, S1, T1, p["conv2_w"], p["conv2_b"], apply_act=True)
    g2, b2 = film_gamma_beta(p["film2"], cond_vec, out_c, out_cp)
    S2, T2 = fold_affine(mu2, m22, total_n, p["bn2_g"], p["bn2_b"], g2, b2)
    return y2, S2, T2


def unet_forward(params, cfg, x_ncl, t, cond=None):
    # PyTorch NCL -> channels-last, lane-padded to 128.
    x = jnp.transpose(x_ncl, (0, 2, 1)).astype(jnp.float32)          # (B, L, C)

    if cfg["cond_channels"] > 0:
        if cond is None:
            raise ValueError("cond tensor required but None provided")
        # TODO(synk): learnable length projection (len_proj ModuleDict) for Lc != Lx not implemented.
        cond_cl = jnp.transpose(cond, (0, 2, 1)).astype(jnp.float32)
        x = x + cond_cl
        x = jnp.concatenate([x, cond_cl], axis=-1)
    elif cond is not None:
        raise ValueError("Model was built with cond_channels=0 but cond tensor was provided")

    x = _pad_last(x, _pad_to_lane(x.shape[-1]))
    B, L, cin_p0 = x.shape

    # Fused time conditioning (sinusoidal embedding + MLP) in one Pallas call.
    cond_vec = time_conditioning(params, t, cfg["time_embed_dim"])    # (B, ted)

    # First conv consumes the raw input: no activation applied to its input.
    zS = jnp.zeros((B, 1, cin_p0), jnp.float32)
    zT = jnp.zeros((B, 1, cin_p0), jnp.float32)

    y, S, T = convblock_apply(params["inc"], x, zS, zT, cond_vec, apply_act=False)
    skips = [(y, S, T, params["inc"]["out_c"])]
    for p_down in params["downs"]:
        y, S, T = convblock_apply(p_down, y, S, T, cond_vec, apply_act=True)
        skips.append((y, S, T, p_down["out_c"]))

    y, S, T = convblock_apply(params["bottleneck"], y, S, T, cond_vec, apply_act=True)
    cur_c = params["bottleneck"]["out_c"]

    for p_up, (ys, Ss, Ts, skip_c) in zip(params["ups"], reversed(skips[:-1])):
        # Deferred activations: concatenate pre-affine y and the matching S,T per channel.
        cat_y = jnp.concatenate([ys[..., :skip_c], y[..., :cur_c]], axis=-1)
        cat_S = jnp.concatenate([Ss[..., :skip_c], S[..., :cur_c]], axis=-1)
        cat_T = jnp.concatenate([Ts[..., :skip_c], T[..., :cur_c]], axis=-1)
        cp = _pad_to_lane(cat_y.shape[-1])
        y, S, T = convblock_apply(p_up, _pad_last(cat_y, cp), _pad_last(cat_S, cp),
                                  _pad_last(cat_T, cp), cond_vec, apply_act=True)
        cur_c = p_up["out_c"]

    out_p = final_conv(y, S, T, params["out_w"], params["out_b"])     # (B, L, Cout_p)
    out = out_p[..., :cfg["in_channels"]]
    return jnp.transpose(out, (0, 2, 1))                              # back to (B, C, L)


# ------------------------------------ main ------------------------------------

if __name__ == "__main__":
    key = jax.random.PRNGKey(0)
    k_param, k_x, k_t = jax.random.split(key, 3)

    cfg = dict(in_channels=1, cond_channels=0, time_embed_dim=32,
               base_channels=8, depth=2)
    params = init_unet(k_param, **cfg)

    B, L = 2, 16
    x = jax.random.normal(k_x, (B, cfg["in_channels"], L), dtype=jnp.float32)
    t = jax.random.randint(k_t, (B,), 0, 1000).astype(jnp.float32)

    # --- spec module: standalone SinusoidalPositionEmbeddings Pallas kernel ---
    emb = jax.block_until_ready(sinusoidal_embedding(t, cfg["time_embed_dim"]))
    half = cfg["time_embed_dim"] // 2
    freq = jnp.exp(jnp.arange(half, dtype=jnp.float32)
                   * (-math.log(10000.0) / (half - 1)))
    arg = t[:, None] * freq[None, :]
    emb_ref = jnp.concatenate([jnp.sin(arg), jnp.cos(arg)], axis=-1)
    assert emb.shape == (B, cfg["time_embed_dim"]), emb.shape
    assert bool(jnp.allclose(emb, emb_ref, atol=2e-2, rtol=0.0))

    # --- full score-network forward built on the Pallas kernels ---
    out = jax.block_until_ready(unet_forward(params, cfg, x, t))
    assert out.shape == (B, cfg["in_channels"], L), out.shape
    assert bool(jnp.all(jnp.isfinite(out)))
    print("KERNEL_OK")
</pallas_src>

<mosaic_0001>
module attributes {stable_mosaic.version = 11 : i64} {
  func.func @_sinusoidal_kernel(%arg0: memref<2x1xf32, #tpu.memory_space<vmem>>, %arg1: memref<1x32xf32, #tpu.memory_space<vmem>>, %arg2: memref<2x32xf32, #tpu.memory_space<vmem>>) attributes {dimension_semantics = [], scalar_prefetch = 0 : i64, scratch_operands = 0 : i64, tpu.core_type = #tpu.core_type<tc>} {
    %c0 = arith.constant 0 : index
    %c0_0 = arith.constant 0 : index
    %0 = vector.load %arg0[%c0, %c0_0] : memref<2x1xf32, #tpu.memory_space<vmem>>, vector<2x1xf32>
    %c0_1 = arith.constant 0 : index
    %c0_2 = arith.constant 0 : index
    %1 = vector.load %arg1[%c0_1, %c0_2] : memref<1x32xf32, #tpu.memory_space<vmem>>, vector<1x32xf32>
    %2 = vector.broadcast %0 : vector<2x1xf32> to vector<2x32xf32>
    %3 = vector.broadcast %1 : vector<1x32xf32> to vector<2x32xf32>
    %4 = arith.mulf %2, %3 : vector<2x32xf32>
    %5 = tpu.iota {dimensions = array<i32: 1>} : vector<2x32xi32>
    %c16_i32 = arith.constant 16 : i32
    %6 = vector.broadcast %c16_i32 : i32 to vector<2x32xi32>
    %7 = arith.cmpi slt, %5, %6 : vector<2x32xi32>
    %8 = math.sin %4 : vector<2x32xf32>
    %9 = math.cos %4 : vector<2x32xf32>
    %10 = arith.select %7, %8, %9 : vector<2x32xi1>, vector<2x32xf32>
    %c0_3 = arith.constant 0 : index
    %c0_4 = arith.constant 0 : index
    %11 = vector.load %arg2[%c0_3, %c0_4] : memref<2x32xf32, #tpu.memory_space<vmem>>, vector<2x32xf32>
    tpu.vector_store %arg2[%c0_3, %c0_4], %10 {strides = array<i32>} : memref<2x32xf32, #tpu.memory_space<vmem>>, vector<2x32xf32>,
    return
  }
}

</mosaic_0001>

<llo_original>
// kernel: tpu_custom_call.1
$region0: #{tpu_custom_call.1}
  #allocation0 [shape = 'u32[]', space=smem, size = 0x4, offset = 0x4, fixed_abs, tag = 'smem constant byte address 0x4 - core index']
  #allocation1 [shape = 'u32[144,128]{1,0:T(1,128)}', space=vmem, size = 0x12000, scoped, tag = 'internal scratch']
  %s0 = inlined_call_operand.vmem [shape: f32[2,1], index: 0, kind: input, shape index: {}]
  %s1 = inlined_call_operand.vmem [shape: f32[1,32], index: 1, kind: input, shape index: {}]
  %s2 = inlined_call_operand.hbm [shape: f32[2,32], index: 2, kind: output, shape index: {}]
  %s3 = sld [smem:[#allocation0]]
  $region18: #{tpu_custom_call.1} parent=0
    _
  %s5 = ssub.s32 1, %s3
  %s6 = scalar_select 0, %s5, %s3
  $region1: #{tpu_custom_call.1} parent=0
    #allocation2 [shape = 'u8[1024]{0}', space=vmem, size = 0x400, scoped, tag = 'output window, operand 0, single buffered']
    #allocation3 [shape = 's32[1]{0}', space=sflag, size = 0x4, scoped, tag = 'scoped memory for tpu_custom_call.1']
    %7 = vsyncpa [#allocation3], 0
    // Predicated region
    $region2: #{tpu_custom_call.1} parent=1 // pred_check
      _
    $region3: #{tpu_custom_call.1} parent=1 // pred_check_branch
      %9 = sbr.rel (0) target = $region5
    $region4: #{tpu_custom_call.1} parent=1 // pred_region
      _
    $region5: #{tpu_custom_call.1} parent=1 // pred_fallthru
      _
    // Predicated region
    $region6: #{tpu_custom_call.1} parent=1 // pred_check
      _
    $region7: #{tpu_custom_call.1} parent=1 // pred_check_branch
      %11 = sbr.rel (0) target = $region9
    $region8: #{tpu_custom_call.1} parent=1 // pred_region
      _
    $region9: #{tpu_custom_call.1} parent=1 // pred_fallthru
      _
    %v12 = vld [vmem:[%s0] sm:$0x3]
    %v13 = vld [vmem:[%s1] sm:$0x1]
    %15 = vset.pattern.permute.xlu0 0
    %16 = vperm.xlu0 %15, %v12
    %v17 = vpop.permute.xlu0 %16
    %v20 = vlaneseq
    %v21 = vshrl.u32 %v20, 7
    %v22 = vsub.s32 0, %v21
    %v23 = vrot.slane %v13, %v22
    %v25 = vmul.f32 %v17, %v23
    %v26 = vlaneseq
    %v27 = vand.u32 %v26, 127
    %vm28 = vcmp.lt.s32.totalorder %v27, 16
    %v29 = vand.u32 2147483647, %v25
    %vm30 = vcmp.le.f32.partialorder %v29, 0.7853982
    %vm31 = vcmp.lt.s32.totalorder %v25, 0
    %v32 = vand.u32 %v25, 2139095040
    %v33 = vshrl.u32 %v32, 23
    %v34 = vsub.s32 %v33, 127
    %v35 = vand.u32 2147483647, %v25
    %v36 = vand.u32 %v35, 8388607
    %v37 = vor.u32 %v36, 8388608
    %v38 = vsub.s32 0, %v37
    %v39 = vadd.s32 %v34, 1
    %vm40 = vcmp.gt.s32.totalorder %v39, 0
    %v41 = vsel %vm40, %v39, 0
    %v42 = vshrl.u32 %v41, 5
    %v43 = vand.u32 %v41, 31
    %v44 = vsub.s32 32, %v43
    %v45 = vshrl.u32 683565275, %v44
    %v46 = vshll.u32 683565275, %v43
    %v47 = vshrl.u32 2475754826, %v44
    %v48 = vor.u32 %v46, %v47
    %v49 = vshll.u32 2475754826, %v43
    %v50 = vshrl.u32 2131351028, %v44
    %v51 = vor.u32 %v49, %v50
    %v52 = vshll.u32 2131351028, %v43
    %v53 = vshrl.u32 2102212464, %v44
    %v54 = vor.u32 %v52, %v53
    %v55 = vshll.u32 2102212464, %v43
    %v56 = vshrl.u32 920167782, %v44
    %v57 = vor.u32 %v55, %v56
    %v58 = vshll.u32 920167782, %v43
    %v59 = vshrl.u32 1326507024, %v44
    %v60 = vor.u32 %v58, %v59
    %vm61 = vcmp.lt.s32.totalorder %v42, 1
    %vm62 = vcmp.lt.s32.totalorder %v42, 2
    %vm63 = vcmp.lt.s32.totalorder %v42, 3
    %vm64 = vcmp.lt.s32.totalorder %v42, 4
    %v65 = vsel %vm61, %v45, %v48
    %v66 = vsel %vm64, %v54, 2102212464
    %v67 = vsel %vm63, %v51, %v66
    %v68 = vsel %vm62, %v65, %v67
    %v69 = vsel %vm61, %v48, %v51
    %v70 = vsel %vm64, %v57, 920167782
    %v71 = vsel %vm63, %v54, %v70
    %v72 = vsel %vm62, %v69, %v71
    %v73 = vsel %vm61, %v51, %v54
    %v74 = vsel %vm64, %v60, 1326507024
    %v75 = vsel %vm63, %v57, %v74
    %v76 = vsel %vm62, %v73, %v75
    %v77 = vshll.u32 %v37, 8
    %v78 = vmul.u32.u64.compose %v77, %v76
    %v79 = vextract.low.u32 %v78
    %v80 = vextract.high.u32 %v78
    %v81 = vmul.u32.u64.compose %v77, %v72
    %v82 = vextract.low.u32 %v81
    %v83 = vextract.high.u32 %v81
    %v84 = vmul.u32 %v77, %v68
    %v85 = vadd.s32 %v80, %v82
    %vm86 = vc.u32 %v80, %v82
    %v87 = vadd.s32 %v83, 1
    %v88 = vsel %vm86, %v87, %v83
    %v89 = vadd.s32 %v84, %v88
    %v90 = vadd.s32 %v89, 536870912
    %v91 = vshrl.u32 %v90, 30
    %v92 = vshll.u32 %v91, 30
    %v93 = vsub.s32 %v89, %v92
    %vm94 = vcmp.lt.s32.totalorder %v93, 0
    %v95 = vsub.s32 0, %v93
    %v96 = vsel %vm94, %v95, %v93
    %v97 = vclz %v96
    %v98 = vsub.s32 %v97, 2
    %vm99 = vcmp.gt.s32.totalorder 0, %v98
    %v100 = vsel %vm99, 0, %v98
    %v101 = vsub.s32 32, %v100
    %v102 = vshll.u32 %v93, %v100
    %v103 = vshrl.u32 %v85, %v101
    %v104 = vor.u32 %v102, %v103
    %v105 = vsub.s32 4294967266, %v100
    %v106 = vadd.s32 %v105, 127
    %v107 = vshll.u32 %v106, 23
    %v108 = vor.u32 4788187, %v107
    %v109 = vand.u32 2147483647, %v108
    %v111 = vcvt.s32.f32 %v104
    %v112 = vmul.f32 %v111, %v109
    %v113 = vxor.u32 %v112, 2147483648
    %v114 = vsel %vm31, %v113, %v112
    %v115 = vsub.s32 4, %v91
    %v116 = vsel %vm31, %v115, %v91
    %v117 = vsel %vm30, %v25, %v114
    %v118 = vsel %vm30, 0, %v116
    %v119 = vcosq.f32.pop %v117
    %v120 = vsinq.f32.pop %v117
    %vm121 = vweird.f32 %v25
    %v122 = vadd.s32 %v118, 3
    %v123 = vand.u32 %v122, 3
    %vm124 = vcmp.lt.s32.totalorder %v123, 2
    %vm125 = vcmp.eq.s32.totalorder %v123, 0
    %v126 = vxor.u32 %v120, 2147483648
    %v127 = vsel %vm125, %v119, %v126
    %vm128 = vcmp.eq.s32.totalorder %v123, 2
    %v129 = vxor.u32 %v119, 2147483648
    %v130 = vsel %vm128, %v129, %v120
    %v131 = vsel %vm124, %v127, %v130
    %v132 = vsel %vm121, nan, %v131
    %v133 = vand.u32 2147483647, %v25
    %vm134 = vcmp.le.f32.partialorder %v133, 0.7853982
    %vm135 = vcmp.lt.s32.totalorder %v25, 0
    %v136 = vand.u32 %v25, 2139095040
    %v137 = vshrl.u32 %v136, 23
    %v138 = vsub.s32 %v137, 127
    %v139 = vand.u32 2147483647, %v25
    %v140 = vand.u32 %v139, 8388607
    %v141 = vor.u32 %v140, 8388608
    %v142 = vsub.s32 0, %v141
    %v143 = vadd.s32 %v138, 1
    %vm144 = vcmp.gt.s32.totalorder %v143, 0
    %v145 = vsel %vm144, %v143, 0
    %v146 = vshrl.u32 %v145, 5
    %v147 = vand.u32 %v145, 31
    %v148 = vsub.s32 32, %v147
    %v149 = vshrl.u32 683565275, %v148
    %v150 = vshll.u32 683565275, %v147
    %v151 = vshrl.u32 2475754826, %v148
    %v152 = vor.u32 %v150, %v151
    %v153 = vshll.u32 2475754826, %v147
    %v154 = vshrl.u32 2131351028, %v148
    %v155 = vor.u32 %v153, %v154
    %v156 = vshll.u32 2131351028, %v147
    %v157 = vshrl.u32 2102212464, %v148
    %v158 = vor.u32 %v156, %v157
    %v159 = vshll.u32 2102212464, %v147
    %v160 = vshrl.u32 920167782, %v148
    %v161 = vor.u32 %v159, %v160
    %v162 = vshll.u32 920167782, %v147
    %v163 = vshrl.u32 1326507024, %v148
    %v164 = vor.u32 %v162, %v163
    %vm165 = vcmp.lt.s32.totalorder %v146, 1
    %vm166 = vcmp.lt.s32.totalorder %v146, 2
    %vm167 = vcmp.lt.s32.totalorder %v146, 3
    %vm168 = vcmp.lt.s32.totalorder %v146, 4
    %v169 = vsel %vm165, %v149, %v152
    %v170 = vsel %vm168, %v158, 2102212464
    %v171 = vsel %vm167, %v155, %v170
    %v172 = vsel %vm166, %v169, %v171
    %v173 = vsel %vm165, %v152, %v155
    %v174 = vsel %vm168, %v161, 920167782
    %v175 = vsel %vm167, %v158, %v174
    %v176 = vsel %vm166, %v173, %v175
    %v177 = vsel %vm165, %v155, %v158
    %v178 = vsel %vm168, %v164, 1326507024
    %v179 = vsel %vm167, %v161, %v178
    %v180 = vsel %vm166, %v177, %v179
    %v181 = vshll.u32 %v141, 8
    %v182 = vmul.u32.u64.compose %v181, %v180
    %v183 = vextract.low.u32 %v182
    %v184 = vextract.high.u32 %v182
    %v185 = vmul.u32.u64.compose %v181, %v176
    %v186 = vextract.low.u32 %v185
    %v187 = vextract.high.u32 %v185
    %v188 = vmul.u32 %v181, %v172
    %v189 = vadd.s32 %v184, %v186
    %vm190 = vc.u32 %v184, %v186
    %v191 = vadd.s32 %v187, 1
    %v192 = vsel %vm190, %v191, %v187
    %v193 = vadd.s32 %v188, %v192
    %v194 = vadd.s32 %v193, 536870912
    %v195 = vshrl.u32 %v194, 30
    %v196 = vshll.u32 %v195, 30
    %v197 = vsub.s32 %v193, %v196
    %vm198 = vcmp.lt.s32.totalorder %v197, 0
    %v199 = vsub.s32 0, %v197
    %v200 = vsel %vm198, %v199, %v197
    %v201 = vclz %v200
    %v202 = vsub.s32 %v201, 2
    %vm203 = vcmp.gt.s32.totalorder 0, %v202
    %v204 = vsel %vm203, 0, %v202
    %v205 = vsub.s32 32, %v204
    %v206 = vshll.u32 %v197, %v204
    %v207 = vshrl.u32 %v189, %v205
    %v208 = vor.u32 %v206, %v207
    %v209 = vsub.s32 4294967266, %v204
    %v210 = vadd.s32 %v209, 127
    %v211 = vshll.u32 %v210, 23
    %v212 = vor.u32 4788187, %v211
    %v213 = vand.u32 2147483647, %v212
    %v215 = vcvt.s32.f32 %v208
    %v216 = vmul.f32 %v215, %v213
    %v217 = vxor.u32 %v216, 2147483648
    %v218 = vsel %vm135, %v217, %v216
    %v219 = vsub.s32 4, %v195
    %v220 = vsel %vm135, %v219, %v195
    %v221 = vsel %vm134, %v25, %v218
    %v222 = vsel %vm134, 0, %v220
    %v223 = vcosq.f32.pop %v221
    %v224 = vsinq.f32.pop %v221
    %vm225 = vweird.f32 %v25
    %v226 = vand.u32 %v222, 3
    %vm227 = vcmp.lt.s32.totalorder %v226, 2
    %vm228 = vcmp.eq.s32.totalorder %v226, 0
    %v229 = vxor.u32 %v224, 2147483648
    %v230 = vsel %vm228, %v223, %v229
    %vm231 = vcmp.eq.s32.totalorder %v226, 2
    %v232 = vxor.u32 %v223, 2147483648
    %v233 = vsel %vm231, %v232, %v224
    %v234 = vsel %vm227, %v230, %v233
    %v235 = vsel %vm225, nan, %v234
    %v236 = vsel %vm28, %v132, %v235
    %vm237 = vcmask 254976
    %238 = vst.msk [vmem:[#allocation2] sm:$0x3] %vm237, %v236
    // Predicated region
    $region10: #{tpu_custom_call.1} parent=1 // pred_check
      _
    $region11: #{tpu_custom_call.1} parent=1 // pred_check_branch
      %240 = sbr.rel (0) target = $region13
    $region12: #{tpu_custom_call.1} parent=1 // pred_region
      %s242 = ssub.s32 32, 32
      %243 = vsyncadd [#allocation3], %s242
      %s245 = sshll.u32 [#allocation2], 4
      %s246 = int_to_ptr.vmem [resolvable:$true] %s245
      %248 = dma.vmem_to_hbm [thread:$0]  %s246, 32, %s2, [#allocation3]
    $region13: #{tpu_custom_call.1} parent=1 // pred_fallthru
      _
    // Predicated region
    $region14: #{tpu_custom_call.1} parent=1 // pred_check
      _
    $region15: #{tpu_custom_call.1} parent=1 // pred_check_branch
      %250 = sbr.rel (0) target = $region17
    $region16: #{tpu_custom_call.1} parent=1 // pred_region
      %251 = dma.done [#allocation3], 32
    $region17: #{tpu_custom_call.1} parent=1 // pred_fallthru
      _
    %252 = vsyncpa [#allocation3], 1

</llo_original>
